<compile_context>
chip_gen: v5e
topology: v5e:2x2
jax: 0.10.0
libtpu: 0.0.40
codegen_flags: <defaults>
</compile_context>

<pallas_src>
import functools
import math

import jax
import jax.numpy as jnp
from jax.experimental import pallas as pl
from jax.experimental.pallas import tpu as pltpu

_LANE = 128
_SUBLANE = 8
_F32_BYTES = 4


def _round_up(x, m):
    return ((x + m - 1) // m) * m


# ---------------------------------------------------------------------------
# Fused Pallas kernel: all classes' MLPs + axis-0 softmax, one tile per step.
# ---------------------------------------------------------------------------
def _adversary_fused_kernel(x_ref, *rest, num_layers: int, n: int, tile_t: int):
    """refs = x, (W0, b0), ..., (W{L-1}, b{L-1}), out.

    x:    (N, TILE_T, D) tile
    W_i:  packed (in_i, out_i)  (layer 0: column-concat; deeper: block-diag;
          last layer padded to a lane-dense multiple of 128 columns)
    b_i:  (1, out_i)
    out:  (N, TILE_T, C_pad) probabilities (softmax over axis 0), lane-dense.
    """
    out_ref = rest[-1]

    # Collapse (N, TILE_T, D) -> (N*TILE_T, D) for the MXU chain.  TILE_T is a
    # multiple of 8 (or the full T), so each n-slab is sublane-tile aligned.
    d_in = x_ref.shape[-1]
    h = x_ref[...].reshape(n * tile_t, d_in)
    for i in range(num_layers):
        w = rest[2 * i][...]
        b = rest[2 * i + 1][...]
        h = jnp.dot(h, w, preferred_element_type=jnp.float32) + b
        if i < num_layers - 1:
            h = jnp.maximum(h, 0.0)  # ReLU on hidden layers only

    # Legacy nn.Softmax() on 3-D input: softmax over dim 0 (the N axis).
    # Full N is inside every tile, so T-tiling does not change the result.
    logits = h.reshape(n, tile_t, h.shape[-1])
    m = jnp.max(logits, axis=0, keepdims=True)
    e = jnp.exp(logits - m)
    s = jnp.sum(e, axis=0, keepdims=True)
    inv = pl.reciprocal(s, approx=True)        # EUP slot (sits next to the exp)
    inv = inv * (2.0 - s * inv)                # one Newton step -> ~f32 accuracy
    out_ref[...] = (e * inv).astype(out_ref.dtype)


def _vmem_bytes_estimate(N, tile_t, D, layer_shapes, c_pad):
    """Rough VMEM need: double-buffered in/out tiles, widest activation, weights."""
    widths = [D] + [o for (_, o) in layer_shapes]
    tiles = 2 * N * tile_t * D * _F32_BYTES + 2 * N * tile_t * c_pad * _F32_BYTES
    acts = 2 * N * tile_t * max(widths) * _F32_BYTES
    weights = 2 * sum(i * o + o for (i, o) in layer_shapes) * _F32_BYTES
    return tiles + acts + weights


def _choose_tile_t(N, T, D, layer_shapes, c_pad, budget_bytes=40 << 20):
    """Largest TILE_T (multiple of 8) within a v7x-safe VMEM budget, targeting
    N*TILE_T >= 512 rows so the 256x256 MXU is filled."""
    if T <= _SUBLANE:
        return T
    target = max(_SUBLANE, _round_up(-(-512 // N), _SUBLANE))
    tile = min(_round_up(T, _SUBLANE), target)
    while tile > _SUBLANE and _vmem_bytes_estimate(N, tile, D, layer_shapes, c_pad) > budget_bytes:
        tile -= _SUBLANE
    return tile


def adversary_fused_forward(z_unk, packed_params, c_pad, tile_t=None):
    """z_unk: (N, T, D); packed_params: [(W_i, b_i)] -> (N, T, c_pad) probabilities."""
    N, T, D = z_unk.shape
    layer_shapes = [(int(W.shape[0]), int(W.shape[1])) for W, _ in packed_params]
    if tile_t is None:
        tile_t = _choose_tile_t(N, T, D, layer_shapes, c_pad)

    T_pad = _round_up(T, tile_t)
    if T_pad != T:
        # Padded t-columns are independent under the axis-0 softmax; sliced off below.
        z_unk = jnp.pad(z_unk, ((0, 0), (0, T_pad - T), (0, 0)))
    grid = (T_pad // tile_t,)

    args = [z_unk]
    in_specs = [pl.BlockSpec((N, tile_t, D), lambda t: (0, t, 0))]
    for W, b in packed_params:
        args += [W, b]
        # Constant index_map: weights/biases stay VMEM-resident across T-tiles.
        in_specs.append(pl.BlockSpec(W.shape, lambda t: (0, 0)))
        in_specs.append(pl.BlockSpec(b.shape, lambda t: (0, 0)))

    est = _vmem_bytes_estimate(N, tile_t, D, layer_shapes, c_pad)
    vmem_limit_bytes = int(min(max(est * 1.5, 8 << 20), 48 << 20))

    kernel = functools.partial(
        _adversary_fused_kernel, num_layers=len(packed_params), n=N, tile_t=tile_t
    )
    out = pl.pallas_call(
        kernel,
        out_shape=jax.ShapeDtypeStruct((N, T_pad, c_pad), jnp.float32),
        grid=grid,
        in_specs=in_specs,
        out_specs=pl.BlockSpec((N, tile_t, c_pad), lambda t: (0, t, 0)),
        compiler_params=pltpu.CompilerParams(
            dimension_semantics=("parallel",),
            vmem_limit_bytes=vmem_limit_bytes,
        ),
    )(*args)
    return out[:, :T, :] if T_pad != T else out


# ---------------------------------------------------------------------------
# Adversary module (parameters built deterministically in-script)
# ---------------------------------------------------------------------------
class AdversaryPallas:
    def __init__(self, input_dim, num_classes, class_sizes, hidden_dims, key):
        assert len(class_sizes) == num_classes
        self.inp_dim = input_dim
        self.K = num_classes
        self.class_sizes = list(class_sizes)
        self.hidden_dims = list(hidden_dims)

        # Per-class parameters, matching nn.Linear default init ranges.
        # params[k] = [(W (in,out), b (out,)), ...]
        self.params = []
        for k in range(self.K):
            layers = []
            prev = input_dim
            dims = list(hidden_dims) + [class_sizes[k]]
            for d in dims:
                key, k_w, k_b = jax.random.split(key, 3)
                bound = 1.0 / math.sqrt(prev)
                W = jax.random.uniform(k_w, (prev, d), jnp.float32, -bound, bound)
                b = jax.random.uniform(k_b, (d,), jnp.float32, -bound, bound)
                layers.append((W, b))
                prev = d
            self.params.append(layers)

        # Pack all classes into one fused parameter set (concat / block-diag).
        self.c_total = sum(self.class_sizes)
        self.c_pad = _round_up(self.c_total, _LANE)
        self.packed = self._pack_params()

    def _pack_params(self):
        # TODO(synk): at production sizes store these in bf16 (f32 accumulate in-kernel).
        K = self.K
        L = len(self.hidden_dims) + 1
        packed = []
        for i in range(L):
            in_tot = self.inp_dim if i == 0 else K * self.hidden_dims[i - 1]
            out_tot = self.c_pad if i == L - 1 else K * self.hidden_dims[i]
            W = jnp.zeros((in_tot, out_tot), jnp.float32)
            b = jnp.zeros((out_tot,), jnp.float32)
            for k in range(K):
                Wk, bk = self.params[k][i]
                in_k, out_k = Wk.shape
                r0 = 0 if i == 0 else k * self.hidden_dims[i - 1]
                if i == L - 1:
                    c0 = sum(self.class_sizes[:k])
                else:
                    c0 = k * self.hidden_dims[i]
                W = W.at[r0:r0 + in_k, c0:c0 + out_k].set(Wk)
                b = b.at[c0:c0 + out_k].set(bk)
            packed.append((W, b.reshape(1, -1)))
        return packed

    def forward(self, z_unk, tile_t=None):
        # z_unk: (N, T, D)
        N, T, D = z_unk.shape
        assert D == self.inp_dim
        # One fused Pallas call (T-tiled grid): all classes' MLPs + axis-0
        # softmax, lane-dense padded output slab.
        out = adversary_fused_forward(z_unk, self.packed, self.c_pad, tile_t=tile_t)
        # Per-class views to match the module's List[Tensor] contract.  If the
        # downstream loss can consume the packed slab + offsets, skip these
        # sub-128 slices entirely.
        pred_ys = []
        off = 0
        for ck in self.class_sizes:
            pred_ys.append(out[:, :, off:off + ck])
            off += ck
        return pred_ys

    # TODO(synk): loss_fn (CrossEntropyLoss) is not part of forward() and is not implemented here.

    # Pure-JAX reference for correctness checking.
    def forward_ref(self, z_unk):
        N, T, D = z_unk.shape
        x2d = z_unk.reshape(N * T, D)
        outs = []
        for layers in self.params:
            h = x2d
            for i, (W, b) in enumerate(layers):
                h = h @ W + b
                if i < len(layers) - 1:
                    h = jnp.maximum(h, 0.0)
            h = h.reshape(N, T, h.shape[-1])
            outs.append(jax.nn.softmax(h, axis=0))
        return outs


if __name__ == "__main__":
    # NOTE: these toy shapes are launch-overhead bound; benchmark/tune only at
    # representative N*T with xprof (min of several runs).
    input_dim = 32
    hidden_dims = [32, 16]
    num_classes = 2
    class_sizes = [4, 3]

    key = jax.random.PRNGKey(0)
    key, k_x1, k_x2, k_p = jax.random.split(key, 4)

    model = AdversaryPallas(input_dim, num_classes, class_sizes, hidden_dims, k_p)

    # Case 1: small T -> single tile (auto TILE_T = T).
    N, T = 2, 8
    z1 = jax.random.normal(k_x1, (N, T, input_dim), dtype=jnp.float32)
    pred_ys = model.forward(z1)
    pred_ys = [jax.block_until_ready(p) for p in pred_ys]
    ref_ys = model.forward_ref(z1)
    for k in range(num_classes):
        assert pred_ys[k].shape == (N, T, class_sizes[k]), pred_ys[k].shape
        assert jnp.allclose(pred_ys[k], ref_ys[k], atol=1e-5, rtol=1e-5), (
            f"mismatch on predictor {k} (single-tile path)"
        )

    # Case 2: multi-step grid over T plus T-padding (forced TILE_T=8, T=20 -> 3 steps).
    N2, T2 = 2, 20
    z2 = jax.random.normal(k_x2, (N2, T2, input_dim), dtype=jnp.float32)
    pred_ys2 = model.forward(z2, tile_t=8)
    pred_ys2 = [jax.block_until_ready(p) for p in pred_ys2]
    ref_ys2 = model.forward_ref(z2)
    for k in range(num_classes):
        assert pred_ys2[k].shape == (N2, T2, class_sizes[k]), pred_ys2[k].shape
        assert jnp.allclose(pred_ys2[k], ref_ys2[k], atol=1e-5, rtol=1e-5), (
            f"mismatch on predictor {k} (gridded path)"
        )

    print("KERNEL_OK")
</pallas_src>

<mosaic_0001>
module attributes {stable_mosaic.version = 11 : i64} {
  func.func @_adversary_fused_kernel(%arg0: i32, %arg1: memref<2x8x32xf32, #tpu.memory_space<vmem>>, %arg2: memref<32x64xf32, #tpu.memory_space<vmem>>, %arg3: memref<1x64xf32, #tpu.memory_space<vmem>>, %arg4: memref<64x32xf32, #tpu.memory_space<vmem>>, %arg5: memref<1x32xf32, #tpu.memory_space<vmem>>, %arg6: memref<32x128xf32, #tpu.memory_space<vmem>>, %arg7: memref<1x128xf32, #tpu.memory_space<vmem>>, %arg8: memref<2x8x128xf32, #tpu.memory_space<vmem>>) attributes {dimension_semantics = [#tpu.dimension_semantics<parallel>], iteration_bounds = array<i64: 1>, scalar_prefetch = 0 : i64, scratch_operands = 0 : i64, tpu.core_type = #tpu.core_type<tc>, window_params = [{transform_indices = @transform_0, window_bounds = array<i64: 2, 8, 32>}, {pipeline_mode = #tpu.pipeline_mode<synchronous>, transform_indices = @transform_1, window_bounds = array<i64: 32, 64>}, {pipeline_mode = #tpu.pipeline_mode<synchronous>, transform_indices = @transform_2, window_bounds = array<i64: 1, 64>}, {pipeline_mode = #tpu.pipeline_mode<synchronous>, transform_indices = @transform_3, window_bounds = array<i64: 64, 32>}, {pipeline_mode = #tpu.pipeline_mode<synchronous>, transform_indices = @transform_4, window_bounds = array<i64: 1, 32>}, {pipeline_mode = #tpu.pipeline_mode<synchronous>, transform_indices = @transform_5, window_bounds = array<i64: 32, 128>}, {pipeline_mode = #tpu.pipeline_mode<synchronous>, transform_indices = @transform_6, window_bounds = array<i64: 1, 128>}, {transform_indices = @transform_7, window_bounds = array<i64: 2, 8, 128>}]} {
    %c0 = arith.constant 0 : index
    %c0_0 = arith.constant 0 : index
    %c0_1 = arith.constant 0 : index
    %0 = vector.load %arg1[%c0, %c0_0, %c0_1] : memref<2x8x32xf32, #tpu.memory_space<vmem>>, vector<2x8x32xf32>
    %1 = vector.shape_cast %0 : vector<2x8x32xf32> to vector<16x32xf32>
    %c0_2 = arith.constant 0 : index
    %c0_3 = arith.constant 0 : index
    %2 = vector.load %arg2[%c0_2, %c0_3] : memref<32x64xf32, #tpu.memory_space<vmem>>, vector<32x64xf32>
    %c0_4 = arith.constant 0 : index
    %c0_5 = arith.constant 0 : index
    %3 = vector.load %arg3[%c0_4, %c0_5] : memref<1x64xf32, #tpu.memory_space<vmem>>, vector<1x64xf32>
    %cst = arith.constant dense<0.000000e+00> : vector<16x64xf32>
    %4 = tpu.matmul %1, %2, %cst {dimension_numbers = #tpu.dot_dimension_numbers<[1], [0], [0], [1], [0, 0, 1, 1], [], []>} : vector<16x32xf32>, vector<32x64xf32>, vector<16x64xf32> -> vector<16x64xf32>
    %5 = vector.broadcast %3 : vector<1x64xf32> to vector<16x64xf32>
    %6 = arith.addf %4, %5 : vector<16x64xf32>
    %cst_6 = arith.constant 0.000000e+00 : f32
    %7 = vector.broadcast %cst_6 : f32 to vector<16x64xf32>
    %8 = arith.maximumf %6, %7 : vector<16x64xf32>
    %c0_7 = arith.constant 0 : index
    %c0_8 = arith.constant 0 : index
    %9 = vector.load %arg4[%c0_7, %c0_8] : memref<64x32xf32, #tpu.memory_space<vmem>>, vector<64x32xf32>
    %c0_9 = arith.constant 0 : index
    %c0_10 = arith.constant 0 : index
    %10 = vector.load %arg5[%c0_9, %c0_10] : memref<1x32xf32, #tpu.memory_space<vmem>>, vector<1x32xf32>
    %cst_11 = arith.constant dense<0.000000e+00> : vector<16x32xf32>
    %11 = tpu.matmul %8, %9, %cst_11 {dimension_numbers = #tpu.dot_dimension_numbers<[1], [0], [0], [1], [0, 0, 1, 1], [], []>} : vector<16x64xf32>, vector<64x32xf32>, vector<16x32xf32> -> vector<16x32xf32>
    %12 = vector.broadcast %10 : vector<1x32xf32> to vector<16x32xf32>
    %13 = arith.addf %11, %12 : vector<16x32xf32>
    %cst_12 = arith.constant 0.000000e+00 : f32
    %14 = vector.broadcast %cst_12 : f32 to vector<16x32xf32>
    %15 = arith.maximumf %13, %14 : vector<16x32xf32>
    %c0_13 = arith.constant 0 : index
    %c0_14 = arith.constant 0 : index
    %16 = vector.load %arg6[%c0_13, %c0_14] : memref<32x128xf32, #tpu.memory_space<vmem>>, vector<32x128xf32>
    %c0_15 = arith.constant 0 : index
    %c0_16 = arith.constant 0 : index
    %17 = vector.load %arg7[%c0_15, %c0_16] : memref<1x128xf32, #tpu.memory_space<vmem>>, vector<1x128xf32>
    %cst_17 = arith.constant dense<0.000000e+00> : vector<16x128xf32>
    %18 = tpu.matmul %15, %16, %cst_17 {dimension_numbers = #tpu.dot_dimension_numbers<[1], [0], [0], [1], [0, 0, 1, 1], [], []>} : vector<16x32xf32>, vector<32x128xf32>, vector<16x128xf32> -> vector<16x128xf32>
    %19 = vector.broadcast %17 : vector<1x128xf32> to vector<16x128xf32>
    %20 = arith.addf %18, %19 : vector<16x128xf32>
    %21 = vector.shape_cast %20 : vector<16x128xf32> to vector<2x8x128xf32>
    %cst_18 = arith.constant dense<0xFF800000> : vector<8x128xf32>
    %22 = vector.multi_reduction <maximumf>, %21, %cst_18 [0] : vector<2x8x128xf32> to vector<8x128xf32>
    %23 = vector.shape_cast %22 : vector<8x128xf32> to vector<1x8x128xf32>
    %24 = vector.broadcast %23 : vector<1x8x128xf32> to vector<2x8x128xf32>
    %25 = arith.subf %21, %24 : vector<2x8x128xf32>
    %26 = math.exp %25 : vector<2x8x128xf32>
    %cst_19 = arith.constant dense<0.000000e+00> : vector<8x128xf32>
    %27 = vector.multi_reduction <add>, %26, %cst_19 [0] : vector<2x8x128xf32> to vector<8x128xf32>
    %28 = vector.shape_cast %27 : vector<8x128xf32> to vector<1x8x128xf32>
    %29 = tpu.reciprocal %28 {approx = true} : vector<1x8x128xf32> -> vector<1x8x128xf32>
    %30 = arith.mulf %28, %29 : vector<1x8x128xf32>
    %cst_20 = arith.constant 2.000000e+00 : f32
    %31 = vector.broadcast %cst_20 : f32 to vector<1x8x128xf32>
    %32 = arith.subf %31, %30 : vector<1x8x128xf32>
    %33 = arith.mulf %29, %32 : vector<1x8x128xf32>
    %34 = vector.broadcast %33 : vector<1x8x128xf32> to vector<2x8x128xf32>
    %35 = arith.mulf %26, %34 : vector<2x8x128xf32>
    %c0_21 = arith.constant 0 : index
    %c0_22 = arith.constant 0 : index
    %c0_23 = arith.constant 0 : index
    %36 = vector.load %arg8[%c0_21, %c0_22, %c0_23] : memref<2x8x128xf32, #tpu.memory_space<vmem>>, vector<2x8x128xf32>
    tpu.vector_store %arg8[%c0_21, %c0_22, %c0_23], %35 {strides = array<i32>} : memref<2x8x128xf32, #tpu.memory_space<vmem>>, vector<2x8x128xf32>,
    return
  }
  func.func @transform_0(%arg0: i32) -> (i32, i32, i32) {
    %c0_i32 = arith.constant 0 : i32
    %c0_i32_0 = arith.constant 0 : i32
    %c0_i32_1 = arith.constant 0 : i32
    return %c0_i32, %arg0, %c0_i32_0 : i32, i32, i32
  }
  func.func @transform_1(%arg0: i32) -> (i32, i32) {
    %c0_i32 = arith.constant 0 : i32
    %c0_i32_0 = arith.constant 0 : i32
    %c0_i32_1 = arith.constant 0 : i32
    return %c0_i32, %c0_i32_0 : i32, i32
  }
  func.func @transform_2(%arg0: i32) -> (i32, i32) {
    %c0_i32 = arith.constant 0 : i32
    %c0_i32_0 = arith.constant 0 : i32
    %c0_i32_1 = arith.constant 0 : i32
    return %c0_i32, %c0_i32_0 : i32, i32
  }
  func.func @transform_3(%arg0: i32) -> (i32, i32) {
    %c0_i32 = arith.constant 0 : i32
    %c0_i32_0 = arith.constant 0 : i32
    %c0_i32_1 = arith.constant 0 : i32
    return %c0_i32, %c0_i32_0 : i32, i32
  }
  func.func @transform_4(%arg0: i32) -> (i32, i32) {
    %c0_i32 = arith.constant 0 : i32
    %c0_i32_0 = arith.constant 0 : i32
    %c0_i32_1 = arith.constant 0 : i32
    return %c0_i32, %c0_i32_0 : i32, i32
  }
  func.func @transform_5(%arg0: i32) -> (i32, i32) {
    %c0_i32 = arith.constant 0 : i32
    %c0_i32_0 = arith.constant 0 : i32
    %c0_i32_1 = arith.constant 0 : i32
    return %c0_i32, %c0_i32_0 : i32, i32
  }
  func.func @transform_6(%arg0: i32) -> (i32, i32) {
    %c0_i32 = arith.constant 0 : i32
    %c0_i32_0 = arith.constant 0 : i32
    %c0_i32_1 = arith.constant 0 : i32
    return %c0_i32, %c0_i32_0 : i32, i32
  }
  func.func @transform_7(%arg0: i32) -> (i32, i32, i32) {
    %c0_i32 = arith.constant 0 : i32
    %c0_i32_0 = arith.constant 0 : i32
    %c0_i32_1 = arith.constant 0 : i32
    return %c0_i32, %arg0, %c0_i32_0 : i32, i32, i32
  }
}

</mosaic_0001>

<llo_original>
// kernel: tpu_custom_call.1
$region0: #{tpu_custom_call.1}
  #allocation0 [shape = 'u32[]', space=smem, size = 0x4, offset = 0x4, fixed_abs, tag = 'smem constant byte address 0x4 - core index']
  #allocation1 [shape = 'u32[72,128]{1,0:T(1,128)}', space=vmem, size = 0x9000, scoped, tag = 'internal scratch']
  %s0 = inlined_call_operand.vmem [shape: f32[2,8,32], index: 0, kind: input, shape index: {}]
  %s1 = inlined_call_operand.vmem [shape: f32[32,64], index: 1, kind: input, shape index: {}]
  %s2 = inlined_call_operand.vmem [shape: f32[1,64], index: 2, kind: input, shape index: {}]
  %s3 = inlined_call_operand.vmem [shape: f32[64,32], index: 3, kind: input, shape index: {}]
  %s4 = inlined_call_operand.vmem [shape: f32[1,32], index: 4, kind: input, shape index: {}]
  %s5 = inlined_call_operand.vmem [shape: f32[32,128], index: 5, kind: input, shape index: {}]
  %s6 = inlined_call_operand.vmem [shape: f32[1,128], index: 6, kind: input, shape index: {}]
  %s7 = inlined_call_operand.hbm [shape: f32[2,8,128], index: 7, kind: output, shape index: {}]
  %s8 = sld [smem:[#allocation0]]
  $region38: #{tpu_custom_call.1} parent=0
    _
  %s10 = ssub.s32 1, %s8
  %s11 = scalar_select 0, %s10, %s8
  $region1: #{tpu_custom_call.1} parent=0
    #allocation2 [shape = 'u8[8192]{0}', space=vmem, size = 0x2000, scoped, tag = 'output window, operand 0, single buffered']
    #allocation3 [shape = 's32[1]{0}', space=sflag, size = 0x4, scoped, tag = 'scoped memory for tpu_custom_call.1']
    %12 = vsyncpa [#allocation3], 0
    // Predicated region
    $region2: #{tpu_custom_call.1} parent=1 // pred_check
      _
    $region3: #{tpu_custom_call.1} parent=1 // pred_check_branch
      %14 = sbr.rel (0) target = $region5
    $region4: #{tpu_custom_call.1} parent=1 // pred_region
      _
    $region5: #{tpu_custom_call.1} parent=1 // pred_fallthru
      _
    // Predicated region
    $region6: #{tpu_custom_call.1} parent=1 // pred_check
      _
    $region7: #{tpu_custom_call.1} parent=1 // pred_check_branch
      %16 = sbr.rel (0) target = $region9
    $region8: #{tpu_custom_call.1} parent=1 // pred_region
      _
    $region9: #{tpu_custom_call.1} parent=1 // pred_fallthru
      _
    // Predicated region
    $region10: #{tpu_custom_call.1} parent=1 // pred_check
      _
    $region11: #{tpu_custom_call.1} parent=1 // pred_check_branch
      %18 = sbr.rel (0) target = $region13
    $region12: #{tpu_custom_call.1} parent=1 // pred_region
      _
    $region13: #{tpu_custom_call.1} parent=1 // pred_fallthru
      _
    // Predicated region
    $region14: #{tpu_custom_call.1} parent=1 // pred_check
      _
    $region15: #{tpu_custom_call.1} parent=1 // pred_check_branch
      %20 = sbr.rel (0) target = $region17
    $region16: #{tpu_custom_call.1} parent=1 // pred_region
      _
    $region17: #{tpu_custom_call.1} parent=1 // pred_fallthru
      _
    // Predicated region
    $region18: #{tpu_custom_call.1} parent=1 // pred_check
      _
    $region19: #{tpu_custom_call.1} parent=1 // pred_check_branch
      %22 = sbr.rel (0) target = $region21
    $region20: #{tpu_custom_call.1} parent=1 // pred_region
      _
    $region21: #{tpu_custom_call.1} parent=1 // pred_fallthru
      _
    // Predicated region
    $region22: #{tpu_custom_call.1} parent=1 // pred_check
      _
    $region23: #{tpu_custom_call.1} parent=1 // pred_check_branch
      %24 = sbr.rel (0) target = $region25
    $region24: #{tpu_custom_call.1} parent=1 // pred_region
      _
    $region25: #{tpu_custom_call.1} parent=1 // pred_fallthru
      _
    // Predicated region
    $region26: #{tpu_custom_call.1} parent=1 // pred_check
      _
    $region27: #{tpu_custom_call.1} parent=1 // pred_check_branch
      %26 = sbr.rel (0) target = $region29
    $region28: #{tpu_custom_call.1} parent=1 // pred_region
      _
    $region29: #{tpu_custom_call.1} parent=1 // pred_fallthru
      _
    %v27 = vld [vmem:[%s0] sm:$0xff]
    %v28 = vld [vmem:[%s0 + $0x8] sm:$0xff]
    %v29 = vld [vmem:[%s1] sm:$0xff]
    %v30 = vld [vmem:[%s1 + $0x8] sm:$0xff]
    %v31 = vld [vmem:[%s1 + $0x10] sm:$0xff]
    %v32 = vld [vmem:[%s1 + $0x18] sm:$0xff]
    %v33 = vld [vmem:[%s2] sm:$0x1]
    %v35 = vperm.slane %v33, 0
    %vm37 = vcmask 261120
    %v39 = vsel %vm37, %v27, 0
    %v42 = vsel %vm37, %v28, 0
    %44 = vmatpush.msra.mxu0 0.0
    %45 = vmatpush.msra.mxu0 0.0
    %46 = vmatpush.msra.mxu0 0.0
    %47 = vmatpush.msra.mxu0 0.0
    %48 = vmatpush.msra.mxu0 0.0
    %49 = vmatpush.msra.mxu0 0.0
    %50 = vmatpush.msra.mxu0 0.0
    %51 = vmatpush.msra.mxu0 0.0
    %52 = vmatpush.msra.mxu0 0.0
    %53 = vmatpush.msra.mxu0 0.0
    %54 = vmatpush.msra.mxu0 0.0
    %55 = vmatpush.msra.mxu0 0.0
    %56 = vmatpush.msra.mxu0 %v32
    %57 = vmatpush.msra.mxu0 %v31
    %58 = vmatpush.msra.mxu0 %v30
    %59 = vmatpush.msra.mxu0 %v29
    %60 = vmatmul.f32.gmra.mxu0 %v39
    %v61 = vpop.f32.mrf.mxu0
    %v62 = vadd.f32 %v35, %v61
    %63 = vmatmul.f32.gmra.mxu0 %v42
    %v64 = vpop.f32.mrf.mxu0
    %v65 = vadd.f32 %v35, %v64
    %66 = vdwg.mxu0
    %v67 = vmax.f32 %v62, 0.0
    %v68 = vmax.f32 %v65, 0.0
    %v69 = vld [vmem:[%s3] sm:$0xff]
    %v70 = vld [vmem:[%s3 + $0x8] sm:$0xff]
    %v71 = vld [vmem:[%s3 + $0x10] sm:$0xff]
    %v72 = vld [vmem:[%s3 + $0x18] sm:$0xff]
    %v73 = vld [vmem:[%s3 + $0x20] sm:$0xff]
    %v74 = vld [vmem:[%s3 + $0x28] sm:$0xff]
    %v75 = vld [vmem:[%s3 + $0x30] sm:$0xff]
    %v76 = vld [vmem:[%s3 + $0x38] sm:$0xff]
    %v77 = vld [vmem:[%s4] sm:$0x1]
    %v79 = vperm.slane %v77, 0
    %vm81 = vcmask 523264
    %v83 = vsel %vm81, %v67, 0
    %v86 = vsel %vm81, %v68, 0
    %88 = vmatpush.msra.mxu0 0.0
    %89 = vmatpush.msra.mxu0 0.0
    %90 = vmatpush.msra.mxu0 0.0
    %91 = vmatpush.msra.mxu0 0.0
    %92 = vmatpush.msra.mxu0 0.0
    %93 = vmatpush.msra.mxu0 0.0
    %94 = vmatpush.msra.mxu0 0.0
    %95 = vmatpush.msra.mxu0 0.0
    %96 = vmatpush.msra.mxu0 %v76
    %97 = vmatpush.msra.mxu0 %v75
    %98 = vmatpush.msra.mxu0 %v74
    %99 = vmatpush.msra.mxu0 %v73
    %100 = vmatpush.msra.mxu0 %v72
    %101 = vmatpush.msra.mxu0 %v71
    %102 = vmatpush.msra.mxu0 %v70
    %103 = vmatpush.msra.mxu0 %v69
    %104 = vmatmul.f32.gmra.mxu0 %v83
    %v105 = vpop.f32.mrf.mxu0
    %v106 = vadd.f32 %v79, %v105
    %107 = vmatmul.f32.gmra.mxu0 %v86
    %v108 = vpop.f32.mrf.mxu0
    %v109 = vadd.f32 %v79, %v108
    %110 = vdwg.mxu0
    %v111 = vmax.f32 %v106, 0.0
    %v112 = vmax.f32 %v109, 0.0
    %v113 = vld [vmem:[%s5] sm:$0xff]
    %v114 = vld [vmem:[%s5 + $0x8] sm:$0xff]
    %v115 = vld [vmem:[%s5 + $0x10] sm:$0xff]
    %v116 = vld [vmem:[%s5 + $0x18] sm:$0xff]
    %v117 = vld [vmem:[%s6] sm:$0x1]
    %v119 = vperm.slane %v117, 0
    %v122 = vsel %vm37, %v111, 0
    %v125 = vsel %vm37, %v112, 0
    %127 = vmatpush.msra.mxu0 0.0
    %128 = vmatpush.msra.mxu0 0.0
    %129 = vmatpush.msra.mxu0 0.0
    %130 = vmatpush.msra.mxu0 0.0
    %131 = vmatpush.msra.mxu0 0.0
    %132 = vmatpush.msra.mxu0 0.0
    %133 = vmatpush.msra.mxu0 0.0
    %134 = vmatpush.msra.mxu0 0.0
    %135 = vmatpush.msra.mxu0 0.0
    %136 = vmatpush.msra.mxu0 0.0
    %137 = vmatpush.msra.mxu0 0.0
    %138 = vmatpush.msra.mxu0 0.0
    %139 = vmatpush.msra.mxu0 %v116
    %140 = vmatpush.msra.mxu0 %v115
    %141 = vmatpush.msra.mxu0 %v114
    %142 = vmatpush.msra.mxu0 %v113
    %143 = vmatmul.f32.gmra.mxu0 %v122
    %v144 = vpop.f32.mrf.mxu0
    %v145 = vadd.f32 %v119, %v144
    %146 = vmatmul.f32.gmra.mxu0 %v125
    %v147 = vpop.f32.mrf.mxu0
    %v148 = vadd.f32 %v119, %v147
    %149 = vdwg.mxu0
    %v150 = vmax.f32 %v145, %v148
    %v151 = vsub.f32 %v145, %v150
    %v152 = vsub.f32 %v148, %v150
    %v153 = vmul.f32 %v151, 1.442695
    %v154 = vpow.pop %v153
    %v155 = vmul.f32 %v152, 1.442695
    %v156 = vpow.pop %v155
    %v157 = vadd.f32 %v154, %v156
    %v158 = vrcp.pop %v157
    %v159 = vmul.f32 %v157, %v158
    %v160 = vsub.f32 2.0, %v159
    %v161 = vmul.f32 %v158, %v160
    %v162 = vmul.f32 %v154, %v161
    %v163 = vmul.f32 %v156, %v161
    %164 = vst [vmem:[#allocation2] sm:$0xff] %v162
    %165 = vst [vmem:[#allocation2 + $0x8] sm:$0xff] %v163
    // Predicated region
    $region30: #{tpu_custom_call.1} parent=1 // pred_check
      _
    $region31: #{tpu_custom_call.1} parent=1 // pred_check_branch
      %167 = sbr.rel (0) target = $region33
    $region32: #{tpu_custom_call.1} parent=1 // pred_region
      %169 = vsyncadd [#allocation3], 0
      %s170 = sshll.u32 [#allocation2], 4
      %s171 = int_to_ptr.vmem [resolvable:$true] %s170
      %s172 = sshll.u32 %s7, 4
      %s173 = int_to_ptr.hbm [resolvable:$true] %s172
      %178 = dma.vmem_to_hbm [thread:$0]  %s171, 256, %s173, [#allocation3], 128, 128, 8
    $region33: #{tpu_custom_call.1} parent=1 // pred_fallthru
      _
    // Predicated region
    $region34: #{tpu_custom_call.1} parent=1 // pred_check
      _
    $region35: #{tpu_custom_call.1} parent=1 // pred_check_branch
      %180 = sbr.rel (0) target = $region37
    $region36: #{tpu_custom_call.1} parent=1 // pred_region
      %182 = dma.done [#allocation3], 256
    $region37: #{tpu_custom_call.1} parent=1 // pred_fallthru
      _
    %183 = vsyncpa [#allocation3], 1

</llo_original>
